<compile_context>
chip_gen: v5e
topology: v5e:2x2
jax: 0.10.0
libtpu: 0.0.40
codegen_flags: <defaults>
</compile_context>

<pallas_src>
import math
import functools

import jax
import jax.numpy as jnp
from jax.experimental import pallas as pl
from jax.experimental.pallas import tpu as pltpu

_LANE = 128
_SUBLANE = 8


def _round_up(x, m):
    return ((x + m - 1) // m) * m


def _gelu_exact(x):
    # PyTorch F.gelu default is the exact erf-based GELU.
    return 0.5 * x * (1.0 + jax.lax.erf(x * (1.0 / math.sqrt(2.0))))


def _policy_kernel(log_std_min, log_std_max, half,
                   s_ref,
                   w1_ref, b1_ref,
                   w2_ref, b2_ref,
                   w3_ref, b3_ref,
                   wh_ref, bh_ref,
                   out_ref):
    cdt = w1_ref.dtype  # GEMM compute dtype (bf16 or f32)

    # Mirror torch.nan_to_num(state) in the PyTorch forward.
    x = jnp.nan_to_num(s_ref[...])

    # fc1 -> gelu   (f32 accumulation, f32 elementwise)
    h = jnp.dot(x, w1_ref[...], preferred_element_type=jnp.float32) + b1_ref[...]
    h = _gelu_exact(h)
    # fc2 -> gelu
    h = jnp.dot(h.astype(cdt), w2_ref[...],
                preferred_element_type=jnp.float32) + b2_ref[...]
    h = _gelu_exact(h)
    # fc3 -> gelu
    h = jnp.dot(h.astype(cdt), w3_ref[...],
                preferred_element_type=jnp.float32) + b3_ref[...]
    h = _gelu_exact(h)

    # Fused mean / log_std head: one GEMM, lane-aligned split at `half`.
    z = jnp.dot(h.astype(cdt), wh_ref[...],
                preferred_element_type=jnp.float32) + bh_ref[...]
    mean = z[:, :half]
    log_std = jnp.clip(z[:, half:], log_std_min, log_std_max)
    std = jnp.exp(log_std)

    # Two lane-aligned (128-multiple) unmasked stores into one lane-dense slab.
    out_ref[:, :half] = mean.astype(out_ref.dtype)
    out_ref[:, half:] = std.astype(out_ref.dtype)


def gaussian_policy_forward(state, params, log_std_min=-20.0, log_std_max=2.0,
                            *, block_batch=256, compute_dtype=jnp.bfloat16):
    """GaussianPolicy forward pass as one Pallas kernel.

    state : (B, state_dim) or (state_dim,) float32
    params: dict w1,b1,w2,b2,w3,b3,wm,bm,wls,bls; weights stored (in, out).
    Returns (mean, std), each (B, action_dim) float32.
    """
    if state.ndim == 1:                      # matches the PyTorch unsqueeze(0)
        state = state[None, :]
    B, state_dim = state.shape
    H = params["w1"].shape[1]
    A = params["wm"].shape[1]

    K_pad = _round_up(state_dim, _LANE)      # padded fc1 contraction dim
    H_pad = _round_up(H, _LANE)              # padded hidden width
    A_pad = _round_up(A, _LANE)              # per-head lane-padded width
    OUT = 2 * A_pad                          # fused lane-dense output width

    # Batch tile: multiple of 8 sublanes, capped by block_batch; B padded up to
    # the tile and sliced back outside.
    TB = _round_up(min(int(block_batch), _round_up(B, _SUBLANE)), _SUBLANE)
    B_pad = _round_up(B, TB)
    grid = (B_pad // TB,)

    cdt = compute_dtype
    f32 = jnp.float32

    def pad2(a, rows, cols):
        a = a.astype(f32)
        return jnp.pad(a, ((0, rows - a.shape[0]), (0, cols - a.shape[1])))

    state_p = pad2(state, B_pad, K_pad).astype(cdt)
    w1 = pad2(params["w1"], K_pad, H_pad).astype(cdt)
    w2 = pad2(params["w2"], H_pad, H_pad).astype(cdt)
    w3 = pad2(params["w3"], H_pad, H_pad).astype(cdt)
    b1 = jnp.pad(params["b1"].astype(f32), (0, H_pad - H)).reshape(1, -1)
    b2 = jnp.pad(params["b2"].astype(f32), (0, H_pad - H)).reshape(1, -1)
    b3 = jnp.pad(params["b3"].astype(f32), (0, H_pad - H)).reshape(1, -1)

    # Pack both heads into one (H_pad, OUT) weight / (1, OUT) bias.
    wh = jnp.zeros((H_pad, OUT), f32)
    wh = wh.at[:H, :A].set(params["wm"].astype(f32))
    wh = wh.at[:H, A_pad:A_pad + A].set(params["wls"].astype(f32))
    wh = wh.astype(cdt)
    bh = jnp.zeros((1, OUT), f32)
    bh = bh.at[0, :A].set(params["bm"].astype(f32))
    bh = bh.at[0, A_pad:A_pad + A].set(params["bls"].astype(f32))

    args = (state_p, w1, b1, w2, b2, w3, b3, wh, bh)

    # Activations tiled over batch; weights/biases block-invariant (VMEM-resident).
    in_specs = [
        pl.BlockSpec((TB, K_pad), lambda i: (i, 0)),       # state tile
        pl.BlockSpec((K_pad, H_pad), lambda i: (0, 0)),    # w1
        pl.BlockSpec((1, H_pad), lambda i: (0, 0)),        # b1
        pl.BlockSpec((H_pad, H_pad), lambda i: (0, 0)),    # w2
        pl.BlockSpec((1, H_pad), lambda i: (0, 0)),        # b2
        pl.BlockSpec((H_pad, H_pad), lambda i: (0, 0)),    # w3
        pl.BlockSpec((1, H_pad), lambda i: (0, 0)),        # b3
        pl.BlockSpec((H_pad, OUT), lambda i: (0, 0)),      # fused head weight
        pl.BlockSpec((1, OUT), lambda i: (0, 0)),          # fused head bias
    ]
    out_specs = pl.BlockSpec((TB, OUT), lambda i: (i, 0))

    flops = 2 * B_pad * (K_pad * H_pad + 2 * H_pad * H_pad + H_pad * OUT)
    transcendentals = B_pad * (3 * H_pad + A_pad)
    bytes_accessed = (sum(int(a.size) * a.dtype.itemsize for a in args)
                      + B_pad * OUT * 4)

    out = pl.pallas_call(
        functools.partial(_policy_kernel,
                          float(log_std_min), float(log_std_max), A_pad),
        out_shape=jax.ShapeDtypeStruct((B_pad, OUT), jnp.float32),
        grid=grid,
        in_specs=in_specs,
        out_specs=out_specs,
        compiler_params=pltpu.CompilerParams(
            dimension_semantics=("parallel",)),
        cost_estimate=pl.CostEstimate(flops=flops,
                                      transcendentals=transcendentals,
                                      bytes_accessed=bytes_accessed),
    )(*args)

    mean = out[:B, :A]
    std = out[:B, A_pad:A_pad + A]
    return mean, std
# TODO(synk): sample()/get_action() (Normal sampling + log_prob) are outside the
# forward pass and left to the host-side JAX wrapper.


def init_params(key, state_dim, action_dim, hidden_dim):
    """Synthetic init mimicking nn.Linear's uniform(-1/sqrt(fan_in), +...)."""
    def linear(k, fan_in, fan_out):
        kw, kb = jax.random.split(k)
        bound = 1.0 / math.sqrt(fan_in)
        w = jax.random.uniform(kw, (fan_in, fan_out), jnp.float32, -bound, bound)
        b = jax.random.uniform(kb, (fan_out,), jnp.float32, -bound, bound)
        return w, b

    keys = jax.random.split(key, 5)
    w1, b1 = linear(keys[0], state_dim, hidden_dim)
    w2, b2 = linear(keys[1], hidden_dim, hidden_dim)
    w3, b3 = linear(keys[2], hidden_dim, hidden_dim)
    wm, bm = linear(keys[3], hidden_dim, action_dim)
    wls, bls = linear(keys[4], hidden_dim, action_dim)
    return dict(w1=w1, b1=b1, w2=w2, b2=b2, w3=w3, b3=b3,
                wm=wm, bm=bm, wls=wls, bls=bls)


def _reference(state, params, log_std_min=-20.0, log_std_max=2.0):
    g = lambda x: 0.5 * x * (1.0 + jax.lax.erf(x / math.sqrt(2.0)))
    s = jnp.nan_to_num(state)
    h = g(s @ params["w1"] + params["b1"])
    h = g(h @ params["w2"] + params["b2"])
    h = g(h @ params["w3"] + params["b3"])
    mean = h @ params["wm"] + params["bm"]
    log_std = jnp.clip(h @ params["wls"] + params["bls"], log_std_min, log_std_max)
    return mean, jnp.exp(log_std)


if __name__ == "__main__":
    key = jax.random.PRNGKey(0)
    k_state, k_p1, k_p2 = jax.random.split(key, 3)

    batch = 20          # deliberately not a multiple of the tile (tests padding)
    state_dim = 16
    action_dim = 8
    hidden_dim = 128

    state = jax.random.normal(k_state, (batch, state_dim), jnp.float32)
    params = init_params(k_p1, state_dim, action_dim, hidden_dim)
    mean_ref, std_ref = _reference(state, params)

    # 1) Exact-semantics path: f32 GEMMs, small batch tile -> multi-step grid.
    mean_f32, std_f32 = gaussian_policy_forward(
        state, params, block_batch=8, compute_dtype=jnp.float32)
    jax.block_until_ready((mean_f32, std_f32))
    assert mean_f32.shape == (batch, action_dim)
    assert std_f32.shape == (batch, action_dim)
    assert jnp.allclose(mean_f32, mean_ref, atol=1e-5, rtol=1e-5)
    assert jnp.allclose(std_f32, std_ref, atol=1e-5, rtol=1e-5)

    # 2) Performance path: bf16 GEMMs (f32 accum), default batch tile.
    mean_bf, std_bf = gaussian_policy_forward(state, params)
    jax.block_until_ready((mean_bf, std_bf))
    assert mean_bf.shape == (batch, action_dim)
    assert std_bf.shape == (batch, action_dim)
    assert jnp.allclose(mean_bf, mean_ref, atol=5e-2, rtol=5e-2)
    assert jnp.allclose(std_bf, std_ref, atol=5e-2, rtol=5e-2)
    assert bool(jnp.all(std_f32 > 0.0)) and bool(jnp.all(std_bf > 0.0))

    # 3) Non-lane-aligned hidden width (exercises H padding), exact f32 path.
    params2 = init_params(k_p2, state_dim, action_dim, 100)
    mean2_ref, std2_ref = _reference(state, params2)
    mean2, std2 = gaussian_policy_forward(
        state, params2, compute_dtype=jnp.float32)
    jax.block_until_ready((mean2, std2))
    assert jnp.allclose(mean2, mean2_ref, atol=1e-5, rtol=1e-5)
    assert jnp.allclose(std2, std2_ref, atol=1e-5, rtol=1e-5)

    # 4) 1-D state (the PyTorch unsqueeze(0) path).
    mean1, std1 = gaussian_policy_forward(
        state[0], params, compute_dtype=jnp.float32)
    jax.block_until_ready((mean1, std1))
    assert mean1.shape == (1, action_dim)
    assert jnp.allclose(mean1[0], mean_ref[0], atol=1e-5, rtol=1e-5)
    assert jnp.allclose(std1[0], std_ref[0], atol=1e-5, rtol=1e-5)

    print("KERNEL_OK")
</pallas_src>

<mosaic_0001>
module attributes {stable_mosaic.version = 11 : i64} {
  func.func @_policy_kernel(%arg0: i32, %arg1: memref<8x128xf32, #tpu.memory_space<vmem>>, %arg2: memref<128x128xf32, #tpu.memory_space<vmem>>, %arg3: memref<1x128xf32, #tpu.memory_space<vmem>>, %arg4: memref<128x128xf32, #tpu.memory_space<vmem>>, %arg5: memref<1x128xf32, #tpu.memory_space<vmem>>, %arg6: memref<128x128xf32, #tpu.memory_space<vmem>>, %arg7: memref<1x128xf32, #tpu.memory_space<vmem>>, %arg8: memref<128x256xf32, #tpu.memory_space<vmem>>, %arg9: memref<1x256xf32, #tpu.memory_space<vmem>>, %arg10: memref<8x256xf32, #tpu.memory_space<vmem>>) attributes {dimension_semantics = [#tpu.dimension_semantics<parallel>], iteration_bounds = array<i64: 3>, scalar_prefetch = 0 : i64, scratch_operands = 0 : i64, tpu.core_type = #tpu.core_type<tc>, window_params = [{transform_indices = @transform_0, window_bounds = array<i64: 8, 128>}, {pipeline_mode = #tpu.pipeline_mode<synchronous>, transform_indices = @transform_1, window_bounds = array<i64: 128, 128>}, {pipeline_mode = #tpu.pipeline_mode<synchronous>, transform_indices = @transform_2, window_bounds = array<i64: 1, 128>}, {pipeline_mode = #tpu.pipeline_mode<synchronous>, transform_indices = @transform_3, window_bounds = array<i64: 128, 128>}, {pipeline_mode = #tpu.pipeline_mode<synchronous>, transform_indices = @transform_4, window_bounds = array<i64: 1, 128>}, {pipeline_mode = #tpu.pipeline_mode<synchronous>, transform_indices = @transform_5, window_bounds = array<i64: 128, 128>}, {pipeline_mode = #tpu.pipeline_mode<synchronous>, transform_indices = @transform_6, window_bounds = array<i64: 1, 128>}, {pipeline_mode = #tpu.pipeline_mode<synchronous>, transform_indices = @transform_7, window_bounds = array<i64: 128, 256>}, {pipeline_mode = #tpu.pipeline_mode<synchronous>, transform_indices = @transform_8, window_bounds = array<i64: 1, 256>}, {transform_indices = @transform_9, window_bounds = array<i64: 8, 256>}]} {
    %c0 = arith.constant 0 : index
    %c0_0 = arith.constant 0 : index
    %0 = vector.load %arg1[%c0, %c0_0] : memref<8x128xf32, #tpu.memory_space<vmem>>, vector<8x128xf32>
    %1 = arith.cmpf one, %0, %0 : vector<8x128xf32>
    %cst = arith.constant 0.000000e+00 : f32
    %2 = vector.broadcast %cst : f32 to vector<8x128xf32>
    %3 = arith.select %1, %2, %0 : vector<8x128xi1>, vector<8x128xf32>
    %cst_1 = arith.constant 0x7F800000 : f32
    %4 = vector.broadcast %cst_1 : f32 to vector<8x128xf32>
    %5 = arith.cmpf oeq, %3, %4 : vector<8x128xf32>
    %cst_2 = arith.constant 3.40282347E+38 : f32
    %6 = vector.broadcast %cst_2 : f32 to vector<8x128xf32>
    %7 = arith.select %5, %6, %3 : vector<8x128xi1>, vector<8x128xf32>
    %cst_3 = arith.constant 0xFF800000 : f32
    %8 = vector.broadcast %cst_3 : f32 to vector<8x128xf32>
    %9 = arith.cmpf oeq, %7, %8 : vector<8x128xf32>
    %cst_4 = arith.constant -3.40282347E+38 : f32
    %10 = vector.broadcast %cst_4 : f32 to vector<8x128xf32>
    %11 = arith.select %9, %10, %7 : vector<8x128xi1>, vector<8x128xf32>
    %c0_5 = arith.constant 0 : index
    %c0_6 = arith.constant 0 : index
    %12 = vector.load %arg2[%c0_5, %c0_6] : memref<128x128xf32, #tpu.memory_space<vmem>>, vector<128x128xf32>
    %cst_7 = arith.constant dense<0.000000e+00> : vector<8x128xf32>
    %13 = tpu.matmul %11, %12, %cst_7 {dimension_numbers = #tpu.dot_dimension_numbers<[1], [0], [0], [1], [0, 0, 1, 1], [], []>} : vector<8x128xf32>, vector<128x128xf32>, vector<8x128xf32> -> vector<8x128xf32>
    %c0_8 = arith.constant 0 : index
    %c0_9 = arith.constant 0 : index
    %14 = vector.load %arg3[%c0_8, %c0_9] : memref<1x128xf32, #tpu.memory_space<vmem>>, vector<1x128xf32>
    %15 = vector.broadcast %14 : vector<1x128xf32> to vector<8x128xf32>
    %16 = arith.addf %13, %15 : vector<8x128xf32>
    %cst_10 = arith.constant 5.000000e-01 : f32
    %17 = vector.broadcast %cst_10 : f32 to vector<8x128xf32>
    %18 = arith.mulf %17, %16 : vector<8x128xf32>
    %cst_11 = arith.constant 0.707106769 : f32
    %19 = vector.broadcast %cst_11 : f32 to vector<8x128xf32>
    %20 = arith.mulf %16, %19 : vector<8x128xf32>
    %21 = math.erf %20 : vector<8x128xf32>
    %cst_12 = arith.constant 1.000000e+00 : f32
    %22 = vector.broadcast %cst_12 : f32 to vector<8x128xf32>
    %23 = arith.addf %22, %21 : vector<8x128xf32>
    %24 = arith.mulf %18, %23 : vector<8x128xf32>
    %c0_13 = arith.constant 0 : index
    %c0_14 = arith.constant 0 : index
    %25 = vector.load %arg4[%c0_13, %c0_14] : memref<128x128xf32, #tpu.memory_space<vmem>>, vector<128x128xf32>
    %cst_15 = arith.constant dense<0.000000e+00> : vector<8x128xf32>
    %26 = tpu.matmul %24, %25, %cst_15 {dimension_numbers = #tpu.dot_dimension_numbers<[1], [0], [0], [1], [0, 0, 1, 1], [], []>} : vector<8x128xf32>, vector<128x128xf32>, vector<8x128xf32> -> vector<8x128xf32>
    %c0_16 = arith.constant 0 : index
    %c0_17 = arith.constant 0 : index
    %27 = vector.load %arg5[%c0_16, %c0_17] : memref<1x128xf32, #tpu.memory_space<vmem>>, vector<1x128xf32>
    %28 = vector.broadcast %27 : vector<1x128xf32> to vector<8x128xf32>
    %29 = arith.addf %26, %28 : vector<8x128xf32>
    %cst_18 = arith.constant 5.000000e-01 : f32
    %30 = vector.broadcast %cst_18 : f32 to vector<8x128xf32>
    %31 = arith.mulf %30, %29 : vector<8x128xf32>
    %cst_19 = arith.constant 0.707106769 : f32
    %32 = vector.broadcast %cst_19 : f32 to vector<8x128xf32>
    %33 = arith.mulf %29, %32 : vector<8x128xf32>
    %34 = math.erf %33 : vector<8x128xf32>
    %cst_20 = arith.constant 1.000000e+00 : f32
    %35 = vector.broadcast %cst_20 : f32 to vector<8x128xf32>
    %36 = arith.addf %35, %34 : vector<8x128xf32>
    %37 = arith.mulf %31, %36 : vector<8x128xf32>
    %c0_21 = arith.constant 0 : index
    %c0_22 = arith.constant 0 : index
    %38 = vector.load %arg6[%c0_21, %c0_22] : memref<128x128xf32, #tpu.memory_space<vmem>>, vector<128x128xf32>
    %cst_23 = arith.constant dense<0.000000e+00> : vector<8x128xf32>
    %39 = tpu.matmul %37, %38, %cst_23 {dimension_numbers = #tpu.dot_dimension_numbers<[1], [0], [0], [1], [0, 0, 1, 1], [], []>} : vector<8x128xf32>, vector<128x128xf32>, vector<8x128xf32> -> vector<8x128xf32>
    %c0_24 = arith.constant 0 : index
    %c0_25 = arith.constant 0 : index
    %40 = vector.load %arg7[%c0_24, %c0_25] : memref<1x128xf32, #tpu.memory_space<vmem>>, vector<1x128xf32>
    %41 = vector.broadcast %40 : vector<1x128xf32> to vector<8x128xf32>
    %42 = arith.addf %39, %41 : vector<8x128xf32>
    %cst_26 = arith.constant 5.000000e-01 : f32
    %43 = vector.broadcast %cst_26 : f32 to vector<8x128xf32>
    %44 = arith.mulf %43, %42 : vector<8x128xf32>
    %cst_27 = arith.constant 0.707106769 : f32
    %45 = vector.broadcast %cst_27 : f32 to vector<8x128xf32>
    %46 = arith.mulf %42, %45 : vector<8x128xf32>
    %47 = math.erf %46 : vector<8x128xf32>
    %cst_28 = arith.constant 1.000000e+00 : f32
    %48 = vector.broadcast %cst_28 : f32 to vector<8x128xf32>
    %49 = arith.addf %48, %47 : vector<8x128xf32>
    %50 = arith.mulf %44, %49 : vector<8x128xf32>
    %c0_29 = arith.constant 0 : index
    %c0_30 = arith.constant 0 : index
    %51 = vector.load %arg8[%c0_29, %c0_30] : memref<128x256xf32, #tpu.memory_space<vmem>>, vector<128x256xf32>
    %cst_31 = arith.constant dense<0.000000e+00> : vector<8x256xf32>
    %52 = tpu.matmul %50, %51, %cst_31 {dimension_numbers = #tpu.dot_dimension_numbers<[1], [0], [0], [1], [0, 0, 1, 1], [], []>} : vector<8x128xf32>, vector<128x256xf32>, vector<8x256xf32> -> vector<8x256xf32>
    %c0_32 = arith.constant 0 : index
    %c0_33 = arith.constant 0 : index
    %53 = vector.load %arg9[%c0_32, %c0_33] : memref<1x256xf32, #tpu.memory_space<vmem>>, vector<1x256xf32>
    %54 = vector.broadcast %53 : vector<1x256xf32> to vector<8x256xf32>
    %55 = arith.addf %52, %54 : vector<8x256xf32>
    %56 = vector.extract_strided_slice %55 {offsets = [0, 0], sizes = [8, 128], strides = [1, 1]} : vector<8x256xf32> to vector<8x128xf32>
    %57 = vector.extract_strided_slice %55 {offsets = [0, 128], sizes = [8, 128], strides = [1, 1]} : vector<8x256xf32> to vector<8x128xf32>
    %cst_34 = arith.constant -2.000000e+01 : f32
    %cst_35 = arith.constant 2.000000e+00 : f32
    %58 = vector.broadcast %cst_34 : f32 to vector<8x128xf32>
    %59 = arith.maximumf %58, %57 : vector<8x128xf32>
    %60 = vector.broadcast %cst_35 : f32 to vector<8x128xf32>
    %61 = arith.minimumf %60, %59 : vector<8x128xf32>
    %62 = math.exp %61 : vector<8x128xf32>
    %c0_36 = arith.constant 0 : index
    %c0_37 = arith.constant 0 : index
    %63 = vector.load %arg10[%c0_36, %c0_37] : memref<8x256xf32, #tpu.memory_space<vmem>>, vector<8x128xf32>
    tpu.vector_store %arg10[%c0_36, %c0_37], %56 {strides = array<i32>} : memref<8x256xf32, #tpu.memory_space<vmem>>, vector<8x128xf32>,
    %c0_38 = arith.constant 0 : index
    %c128 = arith.constant 128 : index
    %64 = vector.load %arg10[%c0_38, %c128] : memref<8x256xf32, #tpu.memory_space<vmem>>, vector<8x128xf32>
    tpu.vector_store %arg10[%c0_38, %c128], %62 {strides = array<i32>} : memref<8x256xf32, #tpu.memory_space<vmem>>, vector<8x128xf32>,
    return
  }
  func.func @transform_0(%arg0: i32) -> (i32, i32) {
    %c0_i32 = arith.constant 0 : i32
    %c0_i32_0 = arith.constant 0 : i32
    return %arg0, %c0_i32 : i32, i32
  }
  func.func @transform_1(%arg0: i32) -> (i32, i32) {
    %c0_i32 = arith.constant 0 : i32
    %c0_i32_0 = arith.constant 0 : i32
    %c0_i32_1 = arith.constant 0 : i32
    return %c0_i32, %c0_i32_0 : i32, i32
  }
  func.func @transform_2(%arg0: i32) -> (i32, i32) {
    %c0_i32 = arith.constant 0 : i32
    %c0_i32_0 = arith.constant 0 : i32
    %c0_i32_1 = arith.constant 0 : i32
    return %c0_i32, %c0_i32_0 : i32, i32
  }
  func.func @transform_3(%arg0: i32) -> (i32, i32) {
    %c0_i32 = arith.constant 0 : i32
    %c0_i32_0 = arith.constant 0 : i32
    %c0_i32_1 = arith.constant 0 : i32
    return %c0_i32, %c0_i32_0 : i32, i32
  }
  func.func @transform_4(%arg0: i32) -> (i32, i32) {
    %c0_i32 = arith.constant 0 : i32
    %c0_i32_0 = arith.constant 0 : i32
    %c0_i32_1 = arith.constant 0 : i32
    return %c0_i32, %c0_i32_0 : i32, i32
  }
  func.func @transform_5(%arg0: i32) -> (i32, i32) {
    %c0_i32 = arith.constant 0 : i32
    %c0_i32_0 = arith.constant 0 : i32
    %c0_i32_1 = arith.constant 0 : i32
    return %c0_i32, %c0_i32_0 : i32, i32
  }
  func.func @transform_6(%arg0: i32) -> (i32, i32) {
    %c0_i32 = arith.constant 0 : i32
    %c0_i32_0 = arith.constant 0 : i32
    %c0_i32_1 = arith.constant 0 : i32
    return %c0_i32, %c0_i32_0 : i32, i32
  }
  func.func @transform_7(%arg0: i32) -> (i32, i32) {
    %c0_i32 = arith.constant 0 : i32
    %c0_i32_0 = arith.constant 0 : i32
    %c0_i32_1 = arith.constant 0 : i32
    return %c0_i32, %c0_i32_0 : i32, i32
  }
  func.func @transform_8(%arg0: i32) -> (i32, i32) {
    %c0_i32 = arith.constant 0 : i32
    %c0_i32_0 = arith.constant 0 : i32
    %c0_i32_1 = arith.constant 0 : i32
    return %c0_i32, %c0_i32_0 : i32, i32
  }
  func.func @transform_9(%arg0: i32) -> (i32, i32) {
    %c0_i32 = arith.constant 0 : i32
    %c0_i32_0 = arith.constant 0 : i32
    return %arg0, %c0_i32 : i32, i32
  }
}

</mosaic_0001>

<llo_original>
// kernel: tpu_custom_call.1
$region0: #{tpu_custom_call.1}
  #allocation0 [shape = 'u32[]', space=smem, size = 0x4, offset = 0x4, fixed_abs, tag = 'smem constant byte address 0x4 - core index']
  #allocation1 [shape = 'u32[72,128]{1,0:T(1,128)}', space=vmem, size = 0x9000, scoped, tag = 'internal scratch']
  %s0 = inlined_call_operand.hbm [shape: f32[24,128], index: 0, kind: input, shape index: {}]
  %s1 = inlined_call_operand.hbm [shape: f32[128,128], index: 1, kind: input, shape index: {}]
  %s2 = inlined_call_operand.vmem [shape: f32[1,128], index: 2, kind: input, shape index: {}]
  %s3 = inlined_call_operand.hbm [shape: f32[128,128], index: 3, kind: input, shape index: {}]
  %s4 = inlined_call_operand.hbm [shape: f32[1,128], index: 4, kind: input, shape index: {}]
  %s5 = inlined_call_operand.hbm [shape: f32[128,128], index: 5, kind: input, shape index: {}]
  %s6 = inlined_call_operand.vmem [shape: f32[1,128], index: 6, kind: input, shape index: {}]
  %s7 = inlined_call_operand.hbm [shape: f32[128,256], index: 7, kind: input, shape index: {}]
  %s8 = inlined_call_operand.vmem [shape: f32[1,256], index: 8, kind: input, shape index: {}]
  %s9 = inlined_call_operand.hbm [shape: f32[24,256], index: 9, kind: output, shape index: {}]
  %s10 = sld [smem:[#allocation0]]
  $region93: #{tpu_custom_call.1} parent=0
    _
  %s12 = ssub.s32 1, %s10
  %s13 = scalar_select 0, %s12, %s10
  $region1: #{tpu_custom_call.1} parent=0
    #allocation2 [shape = 'u8[8192]{0}', space=vmem, size = 0x2000, scoped, tag = 'input window, operand 0']
    #allocation3 [shape = 's32[2]{0}', space=sflag, size = 0x8, scoped, tag = 'scoped memory for tpu_custom_call.1']
    #allocation4 [shape = 's32[2]{0}', space=sflag, size = 0x8, scoped, tag = 'scoped memory for tpu_custom_call.1']
    #allocation5 [shape = 'u8[65536]{0}', space=vmem, size = 0x10000, scoped, tag = 'input window, operand 1, single buffered']
    #allocation6 [shape = 's32[1]{0}', space=sflag, size = 0x4, scoped, tag = 'scoped memory for tpu_custom_call.1']
    #allocation7 [shape = 'u8[65536]{0}', space=vmem, size = 0x10000, scoped, tag = 'input window, operand 3, single buffered']
    #allocation8 [shape = 'u8[512]{0}', space=vmem, size = 0x400, scoped, tag = 'input window, operand 4, single buffered']
    #allocation9 [shape = 's32[1]{0}', space=sflag, size = 0x4, scoped, tag = 'scoped memory for tpu_custom_call.1']
    #allocation10 [shape = 'u8[65536]{0}', space=vmem, size = 0x10000, scoped, tag = 'input window, operand 5, single buffered']
    #allocation11 [shape = 'u8[131072]{0}', space=vmem, size = 0x20000, scoped, tag = 'input window, operand 7, single buffered']
    #allocation12 [shape = 's32[1]{0}', space=sflag, size = 0x4, scoped, tag = 'scoped memory for tpu_custom_call.1']
    #allocation13 [shape = 'u8[16384]{0}', space=vmem, size = 0x4000, scoped, tag = 'output window, operand 0']
    %14 = vsyncpa [#allocation3], 0
    %s15 = scalar_lea.sflag [#allocation3], 1
    %16 = vsyncpa %s15, 0
    %17 = vsyncpa [#allocation6], 0
    %18 = vsyncpa [#allocation9], 0
    %19 = vsyncpa [#allocation12], 0
    %20 = vsyncpa [#allocation4], 0
    %s21 = scalar_lea.sflag [#allocation4], 1
    %22 = vsyncpa %s21, 0
    loop: start=0, step=1, limit=5
    $region2: #{tpu_custom_call.1} parent=1 // loop_pre_header
      _
    $region3: #{tpu_custom_call.1} parent=1 // loop_header
      %s24 = sphi 0, %s28
      %p25 = scmp.ge.s32.totalorder %s24, 5
      %s34 = sphi 0, %s36
      %s37 = sphi 0, %s34
      %s38 = sphi 0, %s37
      %s54 = sphi 0, %s38
      %s58 = sphi 0, %s58
      %s60 = sphi 0, %s58
      %s61 = sphi 0, %s60
      %s75 = sphi 0, %s61
      %s79 = sphi 0, %s79
      %s81 = sphi 0, %s79
      %s82 = sphi 0, %s81
      %s96 = sphi 0, %s82
      %s100 = sphi 0, %s100
      %s102 = sphi 0, %s100
      %s103 = sphi 0, %s102
      %s117 = sphi 0, %s103
      %s121 = sphi 0, %s121
      %s123 = sphi 0, %s121
      %s124 = sphi 0, %s123
      %s138 = sphi 0, %s124
      %s142 = sphi 0, %s142
      %s144 = sphi 0, %s142
      %s145 = sphi 0, %s144
      %s159 = sphi 0, %s145
      %s163 = sphi 0, %s163
      %s165 = sphi 0, %s163
      %s166 = sphi 0, %s165
      %s180 = sphi 0, %s166
      %s184 = sphi 0, %s184
      %s186 = sphi 0, %s184
      %s187 = sphi 0, %s186
      %s201 = sphi 0, %s187
      %s205 = sphi 0, %s205
      %s207 = sphi 0, %s205
      %s208 = sphi 0, %s207
      %s222 = sphi 0, %s208
      %s228 = sphi 0, %s230
      %s231 = sphi 0, %s228
      %s232 = sphi 0, %s231
      %s248 = sphi 0, %s232
    $region4: #{tpu_custom_call.1} parent=1 // loop_header_branch
      %27 = sbr.rel (%p25) target = $region8
    $region5: #{tpu_custom_call.1} parent=1 // loop_body
      %s29 = ssub.s32 %s24, 1
      %s30 = ssub.s32 %s24, 2
      %s31 = sadd.s32 %s24, 1
      %s32 = ssub.s32 %s24, %s31
      %p33 = scmp.eq.s32.totalorder %s32, 0
      %s35 = sadd.s32 %s34, 1
      %s36 = scalar_select %p33, %s34, %s35
      %p39 = pneg %p33
      %p40 = scmp.eq.s32.totalorder %s24, 2
      %p41 = por %p39, %p40
      %p42 = scmp.ne.s32.totalorder %s34, %s37
      %p43 = scmp.eq.s32.totalorder %s24, 0
      %p44 = por %p42, %p43
      %p45 = scmp.ne.s32.totalorder %s34, %s37
      %p46 = scmp.eq.s32.totalorder %s29, 2
      %p47 = por %p45, %p46
      %p48 = scmp.ne.s32.totalorder %s37, %s38
      %p49 = scmp.eq.s32.totalorder %s29, 0
      %p50 = por %p48, %p49
      %p51 = scmp.ne.s32.totalorder %s37, %s38
      %p52 = scmp.eq.s32.totalorder %s30, 2
      %p53 = por %p51, %p52
      %p55 = scmp.ne.s32.totalorder %s38, %s54
      %p56 = scmp.eq.s32.totalorder %s30, 0
      %p57 = por %p55, %p56
      %s59 = sadd.s32 %s58, 1
      %p62 = scmp.eq.s32.totalorder %s24, 2
      %p63 = scmp.ne.s32.totalorder %s58, %s60
      %p64 = scmp.eq.s32.totalorder %s24, 0
      %p65 = por %p63, %p64
      %p66 = scmp.ne.s32.totalorder %s58, %s60
      %p67 = scmp.eq.s32.totalorder %s29, 2
      %p68 = por %p66, %p67
      %p69 = scmp.ne.s32.totalorder %s60, %s61
      %p70 = scmp.eq.s32.totalorder %s29, 0
      %p71 = por %p69, %p70
      %p72 = scmp.ne.s32.totalorder %s60, %s61
      %p73 = scmp.eq.s32.totalorder %s30, 2
      %p74 = por %p72, %p73
      %p76 = scmp.ne.s32.totalorder %s61, %s75
      %p77 = scmp.eq.s32.totalorder %s30, 0
      %p78 = por %p76, %p77
      %s80 = sadd.s32 %s79, 1
      %p83 = scmp.eq.s32.totalorder %s24, 2
      %p84 = scmp.ne.s32.totalorder %s79, %s81
      %p85 = scmp.eq.s32.totalorder %s24, 0
      %p86 = por %p84, %p85
      %p87 = scmp.ne.s32.totalorder %s79, %s81
      %p88 = scmp.eq.s32.totalorder %s29, 2
      %p89 = por %p87, %p88
      %p90 = scmp.ne.s32.totalorder %s81, %s82
      %p91 = scmp.eq.s32.totalorder %s29, 0
      %p92 = por %p90, %p91
      %p93 = scmp.ne.s32.totalorder %s81, %s82
      %p94 = scmp.eq.s32.totalorder %s30, 2
      %p95 = por %p93, %p94
      %p97 = scmp.ne.s32.totalorder %s82, %s96
      %p98 = scmp.eq.s32.totalorder %s30, 0
      %p99 = por %p97, %p98
      %s101 = sadd.s32 %s100, 1
      %p104 = scmp.eq.s32.totalorder %s24, 2
      %p105 = scmp.ne.s32.totalorder %s100, %s102
      %p106 = scmp.eq.s32.totalorder %s24, 0
      %p107 = por %p105, %p106
      %p108 = scmp.ne.s32.totalorder %s100, %s102
      %p109 = scmp.eq.s32.totalorder %s29, 2
      %p110 = por %p108, %p109
      %p111 = scmp.ne.s32.totalorder %s102, %s103
      %p112 = scmp.eq.s32.totalorder %s29, 0
      %p113 = por %p111, %p112
      %p114 = scmp.ne.s32.totalorder %s102, %s103
      %p115 = scmp.eq.s32.totalorder %s30, 2
      %p116 = por %p114, %p115
      %p118 = scmp.ne.s32.totalorder %s103, %s117
      %p119 = scmp.eq.s32.totalorder %s30, 0
      %p120 = por %p118, %p119
      %s122 = sadd.s32 %s121, 1
      %p125 = scmp.eq.s32.totalorder %s24, 2
      %p126 = scmp.ne.s32.totalorder %s121, %s123
      %p127 = scmp.eq.s32.totalorder %s24, 0
      %p128 = por %p126, %p127
      %p129 = scmp.ne.s32.totalorder %s121, %s123
      %p130 = scmp.eq.s32.totalorder %s29, 2
      %p131 = por %p129, %p130
      %p132 = scmp.ne.s32.totalorder %s123, %s124
      %p133 = scmp.eq.s32.totalorder %s29, 0
      %p134 = por %p132, %p133
      %p135 = scmp.ne.s32.totalorder %s123, %s124
      %p136 = scmp.eq.s32.totalorder %s30, 2
      %p137 = por %p135, %p136
      %p139 = scmp.ne.s32.totalorder %s124, %s138
      %p140 = scmp.eq.s32.totalorder %s30, 0
      %p141 = por %p139, %p140
      %s143 = sadd.s32 %s142, 1
      %p146 = scmp.eq.s32.totalorder %s24, 2
      %p147 = scmp.ne.s32.totalorder %s142, %s144
      %p148 = scmp.eq.s32.totalorder %s24, 0
      %p149 = por %p147, %p148
      %p150 = scmp.ne.s32.totalorder %s142, %s144
      %p151 = scmp.eq.s32.totalorder %s29, 2
      %p152 = por %p150, %p151
      %p153 = scmp.ne.s32.totalorder %s144, %s145
      %p154 = scmp.eq.s32.totalorder %s29, 0
      %p155 = por %p153, %p154
      %p156 = scmp.ne.s32.totalorder %s144, %s145
      %p157 = scmp.eq.s32.totalorder %s30, 2
      %p158 = por %p156, %p157
      %p160 = scmp.ne.s32.totalorder %s145, %s159
      %p161 = scmp.eq.s32.totalorder %s30, 0
      %p162 = por %p160, %p161
      %s164 = sadd.s32 %s163, 1
      %p167 = scmp.eq.s32.totalorder %s24, 2
      %p168 = scmp.ne.s32.totalorder %s163, %s165
      %p169 = scmp.eq.s32.totalorder %s24, 0
      %p170 = por %p168, %p169
      %p171 = scmp.ne.s32.totalorder %s163, %s165
      %p172 = scmp.eq.s32.totalorder %s29, 2
      %p173 = por %p171, %p172
      %p174 = scmp.ne.s32.totalorder %s165, %s166
      %p175 = scmp.eq.s32.totalorder %s29, 0
      %p176 = por %p174, %p175
      %p177 = scmp.ne.s32.totalorder %s165, %s166
      %p178 = scmp.eq.s32.totalorder %s30, 2
      %p179 = por %p177, %p178
      %p181 = scmp.ne.s32.totalorder %s166, %s180
      %p182 = scmp.eq.s32.totalorder %s30, 0
      %p183 = por %p181, %p182
      %s185 = sadd.s32 %s184, 1
      %p188 = scmp.eq.s32.totalorder %s24, 2
      %p189 = scmp.ne.s32.totalorder %s184, %s186
      %p190 = scmp.eq.s32.totalorder %s24, 0
      %p191 = por %p189, %p190
      %p192 = scmp.ne.s32.totalorder %s184, %s186
      %p193 = scmp.eq.s32.totalorder %s29, 2
      %p194 = por %p192, %p193
      %p195 = scmp.ne.s32.totalorder %s186, %s187
      %p196 = scmp.eq.s32.totalorder %s29, 0
      %p197 = por %p195, %p196
      %p198 = scmp.ne.s32.totalorder %s186, %s187
      %p199 = scmp.eq.s32.totalorder %s30, 2
      %p200 = por %p198, %p199
      %p202 = scmp.ne.s32.totalorder %s187, %s201
      %p203 = scmp.eq.s32.totalorder %s30, 0
      %p204 = por %p202, %p203
      %s206 = sadd.s32 %s205, 1
      %p209 = scmp.eq.s32.totalorder %s24, 2
      %p210 = scmp.ne.s32.totalorder %s205, %s207
      %p211 = scmp.eq.s32.totalorder %s24, 0
      %p212 = por %p210, %p211
      %p213 = scmp.ne.s32.totalorder %s205, %s207
      %p214 = scmp.eq.s32.totalorder %s29, 2
      %p215 = por %p213, %p214
      %p216 = scmp.ne.s32.totalorder %s207, %s208
      %p217 = scmp.eq.s32.totalorder %s29, 0
      %p218 = por %p216, %p217
      %p219 = scmp.ne.s32.totalorder %s207, %s208
      %p220 = scmp.eq.s32.totalorder %s30, 2
      %p221 = por %p219, %p220
      %p223 = scmp.ne.s32.totalorder %s208, %s222
      %p224 = scmp.eq.s32.totalorder %s30, 0
      %p225 = por %p223, %p224
      %s226 = ssub.s32 %s24, %s31
      %p227 = scmp.eq.s32.totalorder %s226, 0
      %s229 = sadd.s32 %s228, 1
      %s230 = scalar_select %p227, %s228, %s229
      %p233 = pneg %p227
      %p234 = scmp.eq.s32.totalorder %s24, 2
      %p235 = por %p233, %p234
      %p236 = scmp.ne.s32.totalorder %s228, %s231
      %p237 = scmp.eq.s32.totalorder %s24, 0
      %p238 = por %p236, %p237
      %p239 = scmp.ne.s32.totalorder %s228, %s231
      %p240 = scmp.eq.s32.totalorder %s29, 2
      %p241 = por %p239, %p240
      %p242 = scmp.ne.s32.totalorder %s231, %s232
      %p243 = scmp.eq.s32.totalorder %s29, 0
      %p244 = por %p242, %p243
      %p245 = scmp.ne.s32.totalorder %s231, %s232
      %p246 = scmp.eq.s32.totalorder %s30, 2
      %p247 = por %p245, %p246
      %p249 = scmp.ne.s32.totalorder %s232, %s248
      %p250 = scmp.eq.s32.totalorder %s30, 0
      %p251 = por %p249, %p250
      %p252 = scmp.le.s32.totalorder 1, %s24
      %p253 = scmp.lt.s32.totalorder %s24, 4
      %p254 = pnand %p252, %p253
      %p255 = pneg %p254
      // Predicated region
      $region9: #{tpu_custom_call.1} parent=5 // pred_check
        _
      $region10: #{tpu_custom_call.1} parent=5 // pred_check_branch
        %257 = sbr.rel (%p254) target = $region12
      $region11: #{tpu_custom_call.1} parent=5 // pred_region
        %s258 = ssub.s32 %s24, 1
        // Predicated region
        $region13: #{tpu_custom_call.1} parent=11 // pred_check
          %p259 = pneg %p71
        $region14: #{tpu_custom_call.1} parent=11 // pred_check_branch
          %261 = sbr.rel (%p259) target = $region16
        $region15: #{tpu_custom_call.1} parent=11 // pred_region
          %263 = vsyncadd [#allocation6], 0
          %s264 = sshll.u32 %s1, 4
          %s265 = int_to_ptr.hbm [resolvable:$true] %s264
          %s266 = sshll.u32 [#allocation5], 4
          %s267 = int_to_ptr.vmem [resolvable:$true] %s266
          %272 = dma.hbm_to_vmem [thread:$0]  %s265, 2048, %s267, [#allocation6], 128, 128, 8
        $region16: #{tpu_custom_call.1} parent=11 // pred_fallthru
          _
        // Predicated region
        $region17: #{tpu_custom_call.1} parent=11 // pred_check
          %p273 = pneg %p92
        $region18: #{tpu_custom_call.1} parent=11 // pred_check_branch
          %275 = sbr.rel (%p273) target = $region20
        $region19: #{tpu_custom_call.1} parent=11 // pred_region
          _
        $region20: #{tpu_custom_call.1} parent=11 // pred_fallthru
          _
        // Predicated region
        $region21: #{tpu_custom_call.1} parent=11 // pred_check
          %p276 = pneg %p113
        $region22: #{tpu_custom_call.1} parent=11 // pred_check_branch
          %278 = sbr.rel (%p276) target = $region24
        $region23: #{tpu_custom_call.1} parent=11 // pred_region
          %280 = vsyncadd [#allocation6], 0
          %s281 = sshll.u32 %s3, 4
          %s282 = int_to_ptr.hbm [resolvable:$true] %s281
          %s283 = sshll.u32 [#allocation7], 4
          %s284 = int_to_ptr.vmem [resolvable:$true] %s283
          %289 = dma.hbm_to_vmem [thread:$0]  %s282, 2048, %s284, [#allocation6], 128, 128, 8
        $region24: #{tpu_custom_call.1} parent=11 // pred_fallthru
          _
        // Predicated region
        $region25: #{tpu_custom_call.1} parent=11 // pred_check
          %p290 = pneg %p134
        $region26: #{tpu_custom_call.1} parent=11 // pred_check_branch
          %292 = sbr.rel (%p290) target = $region28
        $region27: #{tpu_custom_call.1} parent=11 // pred_region
          %294 = vsyncadd [#allocation9], 0
          %s296 = sshll.u32 %s4, 4
          %s297 = int_to_ptr.hbm [resolvable:$true] %s296
          %s298 = sshll.u32 [#allocation8], 4
          %s299 = int_to_ptr.vmem [resolvable:$true] %s298
          %301 = dma.hbm_to_vmem [thread:$0]  %s297, 16, %s299, [#allocation9]
        $region28: #{tpu_custom_call.1} parent=11 // pred_fallthru
          _
        // Predicated region
        $region29: #{tpu_custom_call.1} parent=11 // pred_check
          %p302 = pneg %p155
        $region30: #{tpu_custom_call.1} parent=11 // pred_check_branch
          %304 = sbr.rel (%p302) target = $region32
        $region31: #{tpu_custom_call.1} parent=11 // pred_region
          %306 = vsyncadd [#allocation9], 0
          %s307 = sshll.u32 %s5, 4
          %s308 = int_to_ptr.hbm [resolvable:$true] %s307
          %s309 = sshll.u32 [#allocation10], 4
          %s310 = int_to_ptr.vmem [resolvable:$true] %s309
          %315 = dma.hbm_to_vmem [thread:$0]  %s308, 2048, %s310, [#allocation9], 128, 128, 8
        $region32: #{tpu_custom_call.1} parent=11 // pred_fallthru
          _
        // Predicated region
        $region33: #{tpu_custom_call.1} parent=11 // pred_check
          %p316 = pneg %p176
        $region34: #{tpu_custom_call.1} parent=11 // pred_check_branch
          %318 = sbr.rel (%p316) target = $region36
        $region35: #{tpu_custom_call.1} parent=11 // pred_region
          _
        $region36: #{tpu_custom_call.1} parent=11 // pred_fallthru
          _
        // Predicated region
        $region37: #{tpu_custom_call.1} parent=11 // pred_check
          %p319 = pneg %p197
        $region38: #{tpu_custom_call.1} parent=11 // pred_check_branch
          %321 = sbr.rel (%p319) target = $region40
        $region39: #{tpu_custom_call.1} parent=11 // pred_region
          %323 = vsyncadd [#allocation12], 0
          %s324 = sshll.u32 %s7, 4
          %s325 = int_to_ptr.hbm [resolvable:$true] %s324
          %s326 = sshll.u32 [#allocation11], 4
          %s327 = int_to_ptr.vmem [resolvable:$true] %s326
          %332 = dma.hbm_to_vmem [thread:$0]  %s325, 4096, %s327, [#allocation12], 256, 256, 16
        $region40: #{tpu_custom_call.1} parent=11 // pred_fallthru
          _
        // Predicated region
        $region41: #{tpu_custom_call.1} parent=11 // pred_check
          %p333 = pneg %p218
        $region42: #{tpu_custom_call.1} parent=11 // pred_check_branch
          %335 = sbr.rel (%p333) target = $region44
        $region43: #{tpu_custom_call.1} parent=11 // pred_region
          _
        $region44: #{tpu_custom_call.1} parent=11 // pred_fallthru
          _
      $region12: #{tpu_custom_call.1} parent=5 // pred_fallthru
        _
      %p336 = scmp.lt.s32.totalorder %s24, 3
      // Predicated region
      $region45: #{tpu_custom_call.1} parent=5 // pred_check
        %p337 = pneg %p336
      $region46: #{tpu_custom_call.1} parent=5 // pred_check_branch
        %339 = sbr.rel (%p337) target = $region48
      $region47: #{tpu_custom_call.1} parent=5 // pred_region
        // Predicated region
        $region49: #{tpu_custom_call.1} parent=47 // pred_check
          %p340 = pneg %p44
        $region50: #{tpu_custom_call.1} parent=47 // pred_check_branch
          %342 = sbr.rel (%p340) target = $region52
        $region51: #{tpu_custom_call.1} parent=47 // pred_region
          %s343 = sand.u32 %s34, 1
          %s344 = scalar_lea.sflag [#allocation3], %s343
          %s345 = sand.u32 %s34, 1
          %s346 = smul.addr %s345, 8
          %s347 = scalar_lea.vmem [#allocation2], %s346
          %349 = vsyncadd %s344, 0
          %s350 = smul.addr %s24, 8
          %s351 = scalar_lea.hbm %s0, %s350
          %s353 = sshll.u32 %s351, 4
          %s354 = int_to_ptr.hbm [resolvable:$true] %s353
          %s355 = sshll.u32 %s347, 4
          %s356 = int_to_ptr.vmem [resolvable:$true] %s355
          %358 = dma.hbm_to_vmem [thread:$0]  %s354, 128, %s356, %s344
        $region52: #{tpu_custom_call.1} parent=47 // pred_fallthru
          _
      $region48: #{tpu_custom_call.1} parent=5 // pred_fallthru
        _
      %p359 = scmp.le.s32.totalorder 1, %s24
      %p360 = scmp.lt.s32.totalorder %s24, 4
      %p361 = pnand %p359, %p360
      %p362 = pneg %p361
      // Predicated region
      $region53: #{tpu_custom_call.1} parent=5 // pred_check
        _
      $region54: #{tpu_custom_call.1} parent=5 // pred_check_branch
        %364 = sbr.rel (%p361) target = $region56
      $region55: #{tpu_custom_call.1} parent=5 // pred_region
        %s365 = ssub.s32 %s24, 1
        %s366 = sand.u32 %s37, 1
        %s367 = scalar_lea.sflag [#allocation3], %s366
        %s368 = sand.u32 %s37, 1
        %s369 = smul.addr %s368, 8
        %s370 = scalar_lea.vmem [#allocation2], %s369
        // Predicated region
        $region57: #{tpu_custom_call.1} parent=55 // pred_check
          %p371 = pneg %p50
        $region58: #{tpu_custom_call.1} parent=55 // pred_check_branch
          %373 = sbr.rel (%p371) target = $region60
        $region59: #{tpu_custom_call.1} parent=55 // pred_region
          %375 = dma.done %s367, 128
        $region60: #{tpu_custom_call.1} parent=55 // pred_fallthru
          _
        // Predicated region
        $region61: #{tpu_custom_call.1} parent=55 // pred_check
          %p376 = pneg %p71
        $region62: #{tpu_custom_call.1} parent=55 // pred_check_branch
          %378 = sbr.rel (%p376) target = $region64
        $region63: #{tpu_custom_call.1} parent=55 // pred_region
          %380 = dma.done [#allocation6], 2048
        $region64: #{tpu_custom_call.1} parent=55 // pred_fallthru
          _
        // Predicated region
        $region65: #{tpu_custom_call.1} parent=55 // pred_check
          %p381 = pneg %p113
        $region66: #{tpu_custom_call.1} parent=55 // pred_check_branch
          %383 = sbr.rel (%p381) target = $region68
        $region67: #{tpu_custom_call.1} parent=55 // pred_region
          %385 = dma.done [#allocation6], 2048
        $region68: #{tpu_custom_call.1} parent=55 // pred_fallthru
          _
        // Predicated region
        $region69: #{tpu_custom_call.1} parent=55 // pred_check
          %p386 = pneg %p134
        $region70: #{tpu_custom_call.1} parent=55 // pred_check_branch
          %388 = sbr.rel (%p386) target = $region72
        $region71: #{tpu_custom_call.1} parent=55 // pred_region
          %390 = dma.done [#allocation9], 16
        $region72: #{tpu_custom_call.1} parent=55 // pred_fallthru
          _
        // Predicated region
        $region73: #{tpu_custom_call.1} parent=55 // pred_check
          %p391 = pneg %p155
        $region74: #{tpu_custom_call.1} parent=55 // pred_check_branch
          %393 = sbr.rel (%p391) target = $region76
        $region75: #{tpu_custom_call.1} parent=55 // pred_region
          %395 = dma.done [#allocation9], 2048
        $region76: #{tpu_custom_call.1} parent=55 // pred_fallthru
          _
        // Predicated region
        $region77: #{tpu_custom_call.1} parent=55 // pred_check
          %p396 = pneg %p197
        $region78: #{tpu_custom_call.1} parent=55 // pred_check_branch
          %398 = sbr.rel (%p396) target = $region80
        $region79: #{tpu_custom_call.1} parent=55 // pred_region
          %400 = dma.done [#allocation12], 4096
        $region80: #{tpu_custom_call.1} parent=55 // pred_fallthru
          _
        %s401 = sand.u32 %s37, 1
        %s402 = scalar_lea.sflag [#allocation3], %s401
        %s403 = sand.u32 %s37, 1
        %s404 = smul.addr %s403, 8
        %s405 = scalar_lea.vmem [#allocation2], %s404
        %p406 = pneg %p50
        %p407 = pneg %p47
        %p408 = pneg %p71
        %p409 = pneg %p68
        %p410 = pneg %p92
        %p411 = pneg %p89
        %p412 = pneg %p113
        %p413 = pneg %p110
        %p414 = pneg %p134
        %p415 = pneg %p131
        %p416 = pneg %p155
        %p417 = pneg %p152
        %p418 = pneg %p176
        %p419 = pneg %p173
        %p420 = pneg %p197
        %p421 = pneg %p194
        %p422 = pneg %p218
        %p423 = pneg %p215
        %p424 = pneg %p244
        %p425 = pneg %p241
        %s426 = sand.u32 %s231, 1
        %s427 = scalar_lea.sflag [#allocation4], %s426
        %s428 = sand.u32 %s231, 1
        %s429 = smul.addr %s428, 16
        %s430 = scalar_lea.vmem [#allocation13], %s429
        %v431 = vld [vmem:[%s370] sm:$0xff]
        %vm432 = vcmp.ne.f32.partialorder %v431, %v431
        %v433 = vsel %vm432, 0.0, %v431
        %vm434 = vcmp.eq.f32.partialorder %v433, inf
        %v435 = vsel %vm434, 3.4028235e+38, %v433
        %vm436 = vcmp.eq.f32.partialorder %v435, -inf
        %v437 = vsel %vm436, -3.4028235e+38, %v435
        %v438 = vld [vmem:[#allocation5] sm:$0xff]
        %v439 = vld [vmem:[#allocation5 + $0x8] sm:$0xff]
        %v440 = vld [vmem:[#allocation5 + $0x10] sm:$0xff]
        %v441 = vld [vmem:[#allocation5 + $0x18] sm:$0xff]
        %v442 = vld [vmem:[#allocation5 + $0x20] sm:$0xff]
        %v443 = vld [vmem:[#allocation5 + $0x28] sm:$0xff]
        %v444 = vld [vmem:[#allocation5 + $0x30] sm:$0xff]
        %v445 = vld [vmem:[#allocation5 + $0x38] sm:$0xff]
        %v446 = vld [vmem:[#allocation5 + $0x40] sm:$0xff]
        %v447 = vld [vmem:[#allocation5 + $0x48] sm:$0xff]
        %v448 = vld [vmem:[#allocation5 + $0x50] sm:$0xff]
        %v449 = vld [vmem:[#allocation5 + $0x58] sm:$0xff]
        %v450 = vld [vmem:[#allocation5 + $0x60] sm:$0xff]
        %v451 = vld [vmem:[#allocation5 + $0x68] sm:$0xff]
        %v452 = vld [vmem:[#allocation5 + $0x70] sm:$0xff]
        %v453 = vld [vmem:[#allocation5 + $0x78] sm:$0xff]
        %v454 = vld [vmem:[%s2] sm:$0x1]
        %v456 = vperm.slane %v454, 0
        %458 = vmatpush.msra.mxu0 %v453
        %459 = vmatpush.msra.mxu0 %v452
        %460 = vmatpush.msra.mxu0 %v451
        %461 = vmatpush.msra.mxu0 %v450
        %462 = vmatpush.msra.mxu0 %v449
        %463 = vmatpush.msra.mxu0 %v448
        %464 = vmatpush.msra.mxu0 %v447
        %465 = vmatpush.msra.mxu0 %v446
        %466 = vmatpush.msra.mxu0 %v445
        %467 = vmatpush.msra.mxu0 %v444
        %468 = vmatpush.msra.mxu0 %v443
        %469 = vmatpush.msra.mxu0 %v442
        %470 = vmatpush.msra.mxu0 %v441
        %471 = vmatpush.msra.mxu0 %v440
        %472 = vmatpush.msra.mxu0 %v439
        %473 = vmatpush.msra.mxu0 %v438
        %474 = vmatmul.f32.gmra.mxu0 %v437
        %v475 = vpop.f32.mrf.mxu0
        %v476 = vadd.f32 %v456, %v475
        %477 = vdwg.mxu0
        %v478 = vmul.f32 %v476, 0.5
        %v479 = vmul.f32 %v476, 0.70710677
        %v480 = vmul.f32 %v479, %v479
        %v481 = vmin.f32 16.0, %v480
        %v482 = vmul.f32 %v481, 2.1237322e-06
        %v483 = vadd.f32 %v482, 0.00028619796
        %v484 = vmul.f32 %v481, %v483
        %v485 = vadd.f32 %v484, 0.0036580483
        %v486 = vmul.f32 %v481, %v485
        %v487 = vadd.f32 %v486, 0.05243302
        %v488 = vmul.f32 %v481, %v487
        %v489 = vadd.f32 %v488, 0.18741608
        %v490 = vmul.f32 %v481, %v489
        %v491 = vadd.f32 %v490, 1.1283791
        %v492 = vmul.f32 %v479, %v491
        %v493 = vmul.f32 %v481, 3.8918573e-05
        %v494 = vadd.f32 %v493, 0.001143296
        %v495 = vmul.f32 %v481, %v494
        %v496 = vadd.f32 %v495, 0.014752088
        %v497 = vmul.f32 %v481, %v496
        %v498 = vadd.f32 %v497, 0.112945676
        %v499 = vmul.f32 %v481, %v498
        %v500 = vadd.f32 %v499, 0.4994258
        %v501 = vmul.f32 %v481, %v500
        %v502 = vadd.f32 %v501, 1.0
        %v503 = vrcp.pop %v502
        %v504 = vmul.f32 %v502, %v503
        %v505 = vsub.f32 1.0, %v504
        %v506 = vmul.f32 %v503, %v505
        %v507 = vadd.f32 %v503, %v506
        %vm508 = vweird.f32 %v502
        %vm509 = vweird.f32 %v503
        %vm510 = vmor %vm508, %vm509
        %v511 = vsel %vm510, %v503, %v507
        %v512 = vand.u32 2147483647, %v502
        %vm513 = vcmp.eq.f32.partialorder %v512, 8.507059e+37
        %v514 = vand.u32 %v502, 2147483648
        %v515 = vor.u32 1.1754944e-38, %v514
        %v516 = vsel %vm513, %v515, %v511
        %v517 = vmul.f32 %v492, %v516
        %v518 = vmin.f32 %v517, 1.0
        %v519 = vmax.f32 %v518, -1.0
        %v520 = vadd.f32 %v519, 1.0
        %v521 = vmul.f32 %v478, %v520
        %v522 = vld [vmem:[#allocation7] sm:$0xff]
        %v523 = vld [vmem:[#allocation7 + $0x8] sm:$0xff]
        %v524 = vld [vmem:[#allocation7 + $0x10] sm:$0xff]
        %v525 = vld [vmem:[#allocation7 + $0x18] sm:$0xff]
        %v526 = vld [vmem:[#allocation7 + $0x20] sm:$0xff]
        %v527 = vld [vmem:[#allocation7 + $0x28] sm:$0xff]
        %v528 = vld [vmem:[#allocation7 + $0x30] sm:$0xff]
        %v529 = vld [vmem:[#allocation7 + $0x38] sm:$0xff]
        %v530 = vld [vmem:[#allocation7 + $0x40] sm:$0xff]
        %v531 = vld [vmem:[#allocation7 + $0x48] sm:$0xff]
        %v532 = vld [vmem:[#allocation7 + $0x50] sm:$0xff]
        %v533 = vld [vmem:[#allocation7 + $0x58] sm:$0xff]
        %v534 = vld [vmem:[#allocation7 + $0x60] sm:$0xff]
        %v535 = vld [vmem:[#allocation7 + $0x68] sm:$0xff]
        %v536 = vld [vmem:[#allocation7 + $0x70] sm:$0xff]
        %v537 = vld [vmem:[#allocation7 + $0x78] sm:$0xff]
        %v538 = vld [vmem:[#allocation8] sm:$0x1]
        %v540 = vperm.slane %v538, 0
        %542 = vmatpush.msra.mxu0 %v537
        %543 = vmatpush.msra.mxu0 %v536
        %544 = vmatpush.msra.mxu0 %v535
        %545 = vmatpush.msra.mxu0 %v534
        %546 = vmatpush.msra.mxu0 %v533
        %547 = vmatpush.msra.mxu0 %v532
        %548 = vmatpush.msra.mxu0 %v531
        %549 = vmatpush.msra.mxu0 %v530
        %550 = vmatpush.msra.mxu0 %v529
        %551 = vmatpush.msra.mxu0 %v528
        %552 = vmatpush.msra.mxu0 %v527
        %553 = vmatpush.msra.mxu0 %v526
        %554 = vmatpush.msra.mxu0 %v525
        %555 = vmatpush.msra.mxu0 %v524
        %556 = vmatpush.msra.mxu0 %v523
        %557 = vmatpush.msra.mxu0 %v522
        %558 = vmatmul.f32.gmra.mxu0 %v521
        %v559 = vpop.f32.mrf.mxu0
        %v560 = vadd.f32 %v540, %v559
        %561 = vdwg.mxu0
        %v562 = vmul.f32 %v560, 0.5
        %v563 = vmul.f32 %v560, 0.70710677
        %v564 = vmul.f32 %v563, %v563
        %v565 = vmin.f32 16.0, %v564
        %v566 = vmul.f32 %v565, 2.1237322e-06
        %v567 = vadd.f32 %v566, 0.00028619796
        %v568 = vmul.f32 %v565, %v567
        %v569 = vadd.f32 %v568, 0.0036580483
        %v570 = vmul.f32 %v565, %v569
        %v571 = vadd.f32 %v570, 0.05243302
        %v572 = vmul.f32 %v565, %v571
        %v573 = vadd.f32 %v572, 0.18741608
        %v574 = vmul.f32 %v565, %v573
        %v575 = vadd.f32 %v574, 1.1283791
        %v576 = vmul.f32 %v563, %v575
        %v577 = vmul.f32 %v565, 3.8918573e-05
        %v578 = vadd.f32 %v577, 0.001143296
        %v579 = vmul.f32 %v565, %v578
        %v580 = vadd.f32 %v579, 0.014752088
        %v581 = vmul.f32 %v565, %v580
        %v582 = vadd.f32 %v581, 0.112945676
        %v583 = vmul.f32 %v565, %v582
        %v584 = vadd.f32 %v583, 0.4994258
        %v585 = vmul.f32 %v565, %v584
        %v586 = vadd.f32 %v585, 1.0
        %v587 = vrcp.pop %v586
        %v588 = vmul.f32 %v586, %v587
        %v589 = vsub.f32 1.0, %v588
        %v590 = vmul.f32 %v587, %v589
        %v591 = vadd.f32 %v587, %v590
        %vm592 = vweird.f32 %v586
        %vm593 = vweird.f32 %v587
        %vm594 = vmor %vm592, %vm593
        %v595 = vsel %vm594, %v587, %v591
        %v596 = vand.u32 2147483647, %v586
        %vm597 = vcmp.eq.f32.partialorder %v596, 8.507059e+37
        %v598 = vand.u32 %v586, 2147483648
        %v599 = vor.u32 1.1754944e-38, %v598
        %v600 = vsel %vm597, %v599, %v595
        %v601 = vmul.f32 %v576, %v600
        %v602 = vmin.f32 %v601, 1.0
        %v603 = vmax.f32 %v602, -1.0
        %v604 = vadd.f32 %v603, 1.0
        %v605 = vmul.f32 %v562, %v604
        %v606 = vld [vmem:[#allocation10] sm:$0xff]
        %v607 = vld [vmem:[#allocation10 + $0x8] sm:$0xff]
        %v608 = vld [vmem:[#allocation10 + $0x10] sm:$0xff]
        %v609 = vld [vmem:[#allocation10 + $0x18] sm:$0xff]
        %v610 = vld [vmem:[#allocation10 + $0x20] sm:$0xff]
        %v611 = vld [vmem:[#allocation10 + $0x28] sm:$0xff]
        %v612 = vld [vmem:[#allocation10 + $0x30] sm:$0xff]
        %v613 = vld [vmem:[#allocation10 + $0x38] sm:$0xff]
        %v614 = vld [vmem:[#allocation10 + $0x40] sm:$0xff]
        %v615 = vld [vmem:[#allocation10 + $0x48] sm:$0xff]
        %v616 = vld [vmem:[#allocation10 + $0x50] sm:$0xff]
        %v617 = vld [vmem:[#allocation10 + $0x58] sm:$0xff]
        %v618 = vld [vmem:[#allocation10 + $0x60] sm:$0xff]
        %v619 = vld [vmem:[#allocation10 + $0x68] sm:$0xff]
        %v620 = vld [vmem:[#allocation10 + $0x70] sm:$0xff]
        %v621 = vld [vmem:[#allocation10 + $0x78] sm:$0xff]
        %v622 = vld [vmem:[%s6] sm:$0x1]
        %v624 = vperm.slane %v622, 0
        %626 = vmatpush.msra.mxu0 %v621
        %627 = vmatpush.msra.mxu0 %v620
        %628 = vmatpush.msra.mxu0 %v619
        %629 = vmatpush.msra.mxu0 %v618
        %630 = vmatpush.msra.mxu0 %v617
        %631 = vmatpush.msra.mxu0 %v616
        %632 = vmatpush.msra.mxu0 %v615
        %633 = vmatpush.msra.mxu0 %v614
        %634 = vmatpush.msra.mxu0 %v613
        %635 = vmatpush.msra.mxu0 %v612
        %636 = vmatpush.msra.mxu0 %v611
        %637 = vmatpush.msra.mxu0 %v610
        %638 = vmatpush.msra.mxu0 %v609
        %639 = vmatpush.msra.mxu0 %v608
        %640 = vmatpush.msra.mxu0 %v607
        %641 = vmatpush.msra.mxu0 %v606
        %642 = vmatmul.f32.gmra.mxu0 %v605
        %v643 = vpop.f32.mrf.mxu0
        %v644 = vadd.f32 %v624, %v643
        %645 = vdwg.mxu0
        %v646 = vmul.f32 %v644, 0.5
        %v647 = vmul.f32 %v644, 0.70710677
        %v648 = vmul.f32 %v647, %v647
        %v649 = vmin.f32 16.0, %v648
        %v650 = vmul.f32 %v649, 2.1237322e-06
        %v651 = vadd.f32 %v650, 0.00028619796
        %v652 = vmul.f32 %v649, %v651
        %v653 = vadd.f32 %v652, 0.0036580483
        %v654 = vmul.f32 %v649, %v653
        %v655 = vadd.f32 %v654, 0.05243302
        %v656 = vmul.f32 %v649, %v655
        %v657 = vadd.f32 %v656, 0.18741608
        %v658 = vmul.f32 %v649, %v657
        %v659 = vadd.f32 %v658, 1.1283791
        %v660 = vmul.f32 %v647, %v659
        %v661 = vmul.f32 %v649, 3.8918573e-05
        %v662 = vadd.f32 %v661, 0.001143296
        %v663 = vmul.f32 %v649, %v662
        %v664 = vadd.f32 %v663, 0.014752088
        %v665 = vmul.f32 %v649, %v664
        %v666 = vadd.f32 %v665, 0.112945676
        %v667 = vmul.f32 %v649, %v666
        %v668 = vadd.f32 %v667, 0.4994258
        %v669 = vmul.f32 %v649, %v668
        %v670 = vadd.f32 %v669, 1.0
        %v671 = vrcp.pop %v670
        %v672 = vmul.f32 %v670, %v671
        %v673 = vsub.f32 1.0, %v672
        %v674 = vmul.f32 %v671, %v673
        %v675 = vadd.f32 %v671, %v674
        %vm676 = vweird.f32 %v670
        %vm677 = vweird.f32 %v671
        %vm678 = vmor %vm676, %vm677
        %v679 = vsel %vm678, %v671, %v675
        %v680 = vand.u32 2147483647, %v670
        %vm681 = vcmp.eq.f32.partialorder %v680, 8.507059e+37
        %v682 = vand.u32 %v670, 2147483648
        %v683 = vor.u32 1.1754944e-38, %v682
        %v684 = vsel %vm681, %v683, %v679
        %v685 = vmul.f32 %v660, %v684
        %v686 = vmin.f32 %v685, 1.0
        %v687 = vmax.f32 %v686, -1.0
        %v688 = vadd.f32 %v687, 1.0
        %v689 = vmul.f32 %v646, %v688
        %v690 = vld [vmem:[#allocation11] sm:$0xff]
        %v691 = vld [vmem:[#allocation11 + $0x8] sm:$0xff]
        %v692 = vld [vmem:[#allocation11 + $0x10] sm:$0xff]
        %v693 = vld [vmem:[#allocation11 + $0x18] sm:$0xff]
        %v694 = vld [vmem:[#allocation11 + $0x20] sm:$0xff]
        %v695 = vld [vmem:[#allocation11 + $0x28] sm:$0xff]
        %v696 = vld [vmem:[#allocation11 + $0x30] sm:$0xff]
        %v697 = vld [vmem:[#allocation11 + $0x38] sm:$0xff]
        %v698 = vld [vmem:[#allocation11 + $0x40] sm:$0xff]
        %v699 = vld [vmem:[#allocation11 + $0x48] sm:$0xff]
        %v700 = vld [vmem:[#allocation11 + $0x50] sm:$0xff]
        %v701 = vld [vmem:[#allocation11 + $0x58] sm:$0xff]
        %v702 = vld [vmem:[#allocation11 + $0x60] sm:$0xff]
        %v703 = vld [vmem:[#allocation11 + $0x68] sm:$0xff]
        %v704 = vld [vmem:[#allocation11 + $0x70] sm:$0xff]
        %v705 = vld [vmem:[#allocation11 + $0x78] sm:$0xff]
        %v706 = vld [vmem:[#allocation11 + $0x80] sm:$0xff]
        %v707 = vld [vmem:[#allocation11 + $0x88] sm:$0xff]
        %v708 = vld [vmem:[#allocation11 + $0x90] sm:$0xff]
        %v709 = vld [vmem:[#allocation11 + $0x98] sm:$0xff]
        %v710 = vld [vmem:[#allocation11 + $0xa0] sm:$0xff]
        %v711 = vld [vmem:[#allocation11 + $0xa8] sm:$0xff]
        %v712 = vld [vmem:[#allocation11 + $0xb0] sm:$0xff]
        %v713 = vld [vmem:[#allocation11 + $0xb8] sm:$0xff]
        %v714 = vld [vmem:[#allocation11 + $0xc0] sm:$0xff]
        %v715 = vld [vmem:[#allocation11 + $0xc8] sm:$0xff]
        %v716 = vld [vmem:[#allocation11 + $0xd0] sm:$0xff]
        %v717 = vld [vmem:[#allocation11 + $0xd8] sm:$0xff]
        %v718 = vld [vmem:[#allocation11 + $0xe0] sm:$0xff]
        %v719 = vld [vmem:[#allocation11 + $0xe8] sm:$0xff]
        %v720 = vld [vmem:[#allocation11 + $0xf0] sm:$0xff]
        %v721 = vld [vmem:[#allocation11 + $0xf8] sm:$0xff]
        %v722 = vld [vmem:[%s8] sm:$0x3]
        %v724 = vperm.slane %v722, 0
        %v725 = vperm.slane %v722, 1
        %728 = vmatpush.msra.mxu0 %v720
        %729 = vmatpush.msra.mxu0 %v718
        %730 = vmatpush.msra.mxu0 %v716
        %731 = vmatpush.msra.mxu0 %v714
        %732 = vmatpush.msra.mxu0 %v712
        %733 = vmatpush.msra.mxu0 %v710
        %734 = vmatpush.msra.mxu0 %v708
        %735 = vmatpush.msra.mxu0 %v706
        %736 = vmatpush.msra.mxu0 %v704
        %737 = vmatpush.msra.mxu0 %v702
        %738 = vmatpush.msra.mxu0 %v700
        %739 = vmatpush.msra.mxu0 %v698
        %740 = vmatpush.msra.mxu0 %v696
        %741 = vmatpush.msra.mxu0 %v694
        %742 = vmatpush.msra.mxu0 %v692
        %743 = vmatpush.msra.mxu0 %v690
        %744 = vmatmul.f32.gmra.mxu0 %v689
        %v745 = vpop.f32.mrf.mxu0
        %v746 = vadd.f32 %v724, %v745
        %747 = vdwg.mxu0
        %748 = vmatpush.msra.mxu0 %v721
        %749 = vmatpush.msra.mxu0 %v719
        %750 = vmatpush.msra.mxu0 %v717
        %751 = vmatpush.msra.mxu0 %v715
        %752 = vmatpush.msra.mxu0 %v713
        %753 = vmatpush.msra.mxu0 %v711
        %754 = vmatpush.msra.mxu0 %v709
        %755 = vmatpush.msra.mxu0 %v707
        %756 = vmatpush.msra.mxu0 %v705
        %757 = vmatpush.msra.mxu0 %v703
        %758 = vmatpush.msra.mxu0 %v701
        %759 = vmatpush.msra.mxu0 %v699
        %760 = vmatpush.msra.mxu0 %v697
        %761 = vmatpush.msra.mxu0 %v695
        %762 = vmatpush.msra.mxu0 %v693
        %763 = vmatpush.msra.mxu0 %v691
        %764 = vmatmul.f32.gmra.mxu0 %v689
        %v765 = vpop.f32.mrf.mxu0
        %v766 = vadd.f32 %v725, %v765
        %767 = vdwg.mxu0
        %v768 = vmax.f32 %v766, -20.0
        %v769 = vmin.f32 %v768, 2.0
        %v770 = vmul.f32 %v769, 1.442695
        %v771 = vpow.pop %v770
        %772 = vst [vmem:[%s430] sm:$0xff] %v746
        %773 = vst [vmem:[%s430 + $0x8] sm:$0xff] %v771
        %s774 = sand.u32 %s231, 1
        %s775 = scalar_lea.sflag [#allocation4], %s774
        %s776 = sand.u32 %s231, 1
        %s777 = smul.addr %s776, 16
        %s778 = scalar_lea.vmem [#allocation13], %s777
        // Predicated region
        $region81: #{tpu_custom_call.1} parent=55 // pred_check
          %p779 = pneg %p241
        $region82: #{tpu_custom_call.1} parent=55 // pred_check_branch
          %781 = sbr.rel (%p779) target = $region84
        $region83: #{tpu_custom_call.1} parent=55 // pred_region
          %783 = vsyncadd %s775, 0
          %s784 = smul.addr %s29, 2
          %s785 = smul.addr %s784, 8
          %s786 = scalar_lea.hbm %s9, %s785
          %s788 = sshll.u32 %s778, 4
          %s789 = int_to_ptr.vmem [resolvable:$true] %s788
          %s790 = sshll.u32 %s786, 4
          %s791 = int_to_ptr.hbm [resolvable:$true] %s790
          %793 = dma.vmem_to_hbm [thread:$0]  %s789, 256, %s791, %s775
        $region84: #{tpu_custom_call.1} parent=55 // pred_fallthru
          _
      $region56: #{tpu_custom_call.1} parent=5 // pred_fallthru
        _
      %p794 = scmp.le.s32.totalorder 2, %s24
      // Predicated region
      $region85: #{tpu_custom_call.1} parent=5 // pred_check
        %p795 = pneg %p794
      $region86: #{tpu_custom_call.1} parent=5 // pred_check_branch
        %797 = sbr.rel (%p795) target = $region88
      $region87: #{tpu_custom_call.1} parent=5 // pred_region
        %s798 = ssub.s32 %s24, 2
        // Predicated region
        $region89: #{tpu_custom_call.1} parent=87 // pred_check
          %p799 = pneg %p247
        $region90: #{tpu_custom_call.1} parent=87 // pred_check_branch
          %801 = sbr.rel (%p799) target = $region92
        $region91: #{tpu_custom_call.1} parent=87 // pred_region
          %s802 = sand.u32 %s232, 1
          %s803 = scalar_lea.sflag [#allocation4], %s802
          %s804 = sand.u32 %s232, 1
          %s805 = smul.addr %s804, 16
          %s806 = scalar_lea.vmem [#allocation13], %s805
          %808 = dma.done %s803, 256
        $region92: #{tpu_custom_call.1} parent=87 // pred_fallthru
          _
      $region88: #{tpu_custom_call.1} parent=5 // pred_fallthru
        _
    $region6: #{tpu_custom_call.1} parent=1 // loop_footer
      %s28 = sadd.s32 1, %s24
    $region7: #{tpu_custom_call.1} parent=1 // loop_footer_branch
      %23 = sbr.rel target = $region3
    $region8: #{tpu_custom_call.1} parent=1 // loop_exit
      _
    %809 = vsyncpa [#allocation3], 1
    %s810 = scalar_lea.sflag [#allocation3], 1
    %811 = vsyncpa %s810, 1
    %812 = vsyncpa [#allocation6], 1
    %813 = vsyncpa [#allocation9], 1
    %814 = vsyncpa [#allocation12], 1
    %815 = vsyncpa [#allocation4], 1
    %s816 = scalar_lea.sflag [#allocation4], 1
    %817 = vsyncpa %s816, 1

</llo_original>
